<compile_context>
chip_gen: v7x
topology: tpu7x:2x2x1
jax: 0.10.0
libtpu: 0.0.40
codegen_flags: <defaults>
</compile_context>

<pallas_src>
import functools
import math

import jax
import jax.numpy as jnp
from jax.experimental import pallas as pl
from jax.experimental.pallas import tpu as pltpu


def _round_up(x: int, m: int) -> int:
    return ((x + m - 1) // m) * m


def _cdiv(a: int, b: int) -> int:
    return -(-a // b)


def _conv1d_k1_kernel(xm_ref, w_ref, b_ref, o_ref):
    # K == 1: plain (C_out, C_in) x (C_in, TL) matmul, no halo needed.
    acc = jnp.dot(w_ref[...], xm_ref[0], preferred_element_type=jnp.float32)
    o_ref[0] = (acc + b_ref[...]).astype(o_ref.dtype)


def _conv1d_kernel(xm_ref, xh_ref, w_ref, b_ref, o_ref, *,
                   k_size, c_in, tl, halo, fused):
    # xm_ref: (1, C_in, TL)    main input window    [l*TL, (l+1)*TL)
    # xh_ref: (1, C_in, H)     halo window          [(l+1)*TL, (l+1)*TL + H)
    # w_ref : (TCO, K*C_in)    folded weight, w2[co, k*C_in + ci] = w[co, ci, k]
    # b_ref : (TCO, 1)         bias (f32)
    # o_ref : (1, TCO, TL)
    x_main = xm_ref[0]                                    # (C_in, TL)
    x_halo = xh_ref[0]                                    # (C_in, H)
    xw = jnp.concatenate([x_main, x_halo], axis=-1)       # (C_in, TL + H)

    if fused:
        # Small C_in: stack the K taps along sublanes and do ONE MXU push with
        # contraction K*C_in (per-tap dots would waste most of the MXU tile).
        xp = jnp.concatenate([xw[:, k:k + tl] for k in range(k_size)], axis=0)
        acc = jnp.dot(w_ref[...], xp, preferred_element_type=jnp.float32)
    else:
        # MXU-aligned C_in: K accumulated dots.  Shifted views come from an
        # XLU lane-roll + 128-aligned slice -> no (K*C_in, TL) im2col
        # intermediate in VMEM, no lane-unaligned copy builds.
        width = tl + halo
        acc = jnp.dot(w_ref[:, :c_in], xw[:, :tl],
                      preferred_element_type=jnp.float32)
        for k in range(1, k_size):
            xk = pltpu.roll(xw, shift=width - k, axis=1)[:, :tl]
            wk = w_ref[:, k * c_in:(k + 1) * c_in]
            acc = acc + jnp.dot(wk, xk, preferred_element_type=jnp.float32)

    o_ref[0] = (acc + b_ref[...]).astype(o_ref.dtype)


def norm_conv1d(x, weight, bias, *, norm: str = "none", weight_g=None,
                tl: int = 1024, compute_dtype=jnp.bfloat16):
    """Forward of NormConv1d: (optionally weight-norm'd) Conv1d, stride=1, pad=0.

    `compute_dtype` only affects the MXU operand dtypes (accumulation is f32);
    the output dtype always matches x.dtype.
    """
    assert norm in ("none", "weight_norm")

    if norm == "weight_norm":
        # torch.nn.utils.weight_norm(dim=0): w = g * v / ||v||_2 over (C_in, K).
        # No epsilon, matching torch (all-zero filters give NaN there as well).
        v = weight.astype(jnp.float32)
        v_norm = jnp.sqrt(jnp.sum(v * v, axis=(1, 2), keepdims=True))
        if weight_g is None:
            g = v_norm  # torch's value of g right after weight_norm() is applied
        else:
            g = weight_g.astype(jnp.float32).reshape(v_norm.shape)
        weight = (g * v / v_norm).astype(weight.dtype)

    B, C_in, L = x.shape
    C_out, C_in_w, K = weight.shape
    assert C_in == C_in_w
    L_out = L - K + 1
    assert L_out >= 1

    out_dtype = x.dtype                       # output keeps the input precision
    cdt = jnp.dtype(compute_dtype) if compute_dtype is not None else jnp.dtype(x.dtype)
    c_itemsize = cdt.itemsize
    out_itemsize = jnp.dtype(out_dtype).itemsize
    kc = K * C_in

    # ---- C_out tiling: balanced, MXU-granular, full weight resident if it fits.
    # Cap one weight tile at ~8 MiB so the whole working set stays inside
    # v7x's 64 MiB VMEM even with double-buffered x / out tiles.
    max_tco = int(min(1024, max(128, (8 << 20) // max(kc * c_itemsize, 1))))
    n_co = _cdiv(C_out, max_tco)
    gran = 8 if n_co == 1 else 128            # MXU-granular only when C_out is split
    tco = _round_up(_cdiv(C_out, n_co), gran)
    c_out_p = n_co * tco

    # ---- L tiling: lane-dense, halo-aligned tiles ---------------------------
    halo = _round_up(K - 1, 128) if K > 1 else 0
    block = max(halo, 128)
    l_out_128 = _round_up(L_out, 128)
    tl_eff = _round_up(max(128, min(int(tl), l_out_128)), block)
    # Keep the x tile modest so very wide C_in still fits VMEM.
    while tl_eff > block and C_in * tl_eff * c_itemsize > (8 << 20):
        tl_eff -= block
    # v7x has 2 TensorCores: if neither B nor C_out gives a parallel axis >= 2,
    # split the L axis (harmless on single-TC v5e/v6e).
    if B == 1 and n_co == 1 and tl_eff >= l_out_128 and l_out_128 >= 2 * block:
        tl_eff = _round_up(l_out_128 // 2, block)
    n_l = _cdiv(L_out, tl_eff)
    l_out_p = n_l * tl_eff
    hb = tl_eff // halo if halo else 0        # halo-sized blocks per TL

    # ---- one-time parameter / input prep (plain JAX) ------------------------
    x_c = x.astype(cdt)
    w_c = weight.astype(cdt)
    # Fold weight to lane-dense (c_out_p, K*C_in): w2[co, k*C_in + ci] = w[co, ci, k].
    w2 = jnp.transpose(w_c, (0, 2, 1)).reshape(C_out, kc)
    b2 = bias.astype(jnp.float32).reshape(C_out, 1)
    if c_out_p != C_out:
        w2 = jnp.pad(w2, ((0, c_out_p - C_out), (0, 0)))
        b2 = jnp.pad(b2, ((0, c_out_p - C_out), (0, 0)))
    # Pad x only when the tiled windows actually read past L (e.g. never for
    # K == 1 with lane-aligned L).
    need_len = l_out_p + halo
    if need_len > L:
        x_c = jnp.pad(x_c, ((0, 0), (0, 0), (0, need_len - L)))

    fused = C_in < 128    # small C_in -> fused im2col matmul, else per-tap dots

    cost = pl.CostEstimate(
        flops=int(2 * B * c_out_p * C_in * K * l_out_p),
        transcendentals=0,
        bytes_accessed=int(
            B * n_co * C_in * (l_out_p + n_l * halo) * c_itemsize   # x (+halo), re-read per co tile
            + B * n_co * tco * (kc * c_itemsize + 4)                # weight + bias
            + B * c_out_p * l_out_p * out_itemsize))                # out (incl. padding)

    # VMEM residency: double-buffered x/halo/out, weight+bias (2 buffers worst case).
    resid = (2 * (C_in * (tl_eff + halo) * c_itemsize + tco * tl_eff * out_itemsize)
             + 2 * (tco * kc * c_itemsize + tco * 4))
    vmem_limit = int(min(64 << 20, max(32 << 20, resid + (8 << 20))))

    if K > 1:
        kernel = functools.partial(_conv1d_kernel, k_size=K, c_in=C_in,
                                   tl=tl_eff, halo=halo, fused=fused)
    else:
        kernel = _conv1d_k1_kernel

    def _call(single_buffer_params: bool):
        # Weight / bias block index is constant along b and l -> they stay
        # VMEM-resident; single-buffering them halves their VMEM footprint.
        pm = dict(pipeline_mode=pl.Buffered(1)) if single_buffer_params else {}
        in_specs = [pl.BlockSpec((1, C_in, tl_eff), lambda b, co, l: (b, 0, l))]
        inputs = [x_c]
        if K > 1:
            # halo: first `halo` elements of the NEXT tile, [(l+1)*TL, (l+1)*TL + halo)
            in_specs.append(pl.BlockSpec((1, C_in, halo),
                                         lambda b, co, l: (b, 0, (l + 1) * hb)))
            inputs.append(x_c)
        in_specs.append(pl.BlockSpec((tco, kc), lambda b, co, l: (co, 0), **pm))
        in_specs.append(pl.BlockSpec((tco, 1), lambda b, co, l: (co, 0), **pm))
        inputs += [w2, b2]
        return pl.pallas_call(
            kernel,
            out_shape=jax.ShapeDtypeStruct((B, c_out_p, l_out_p), out_dtype),
            grid_spec=pltpu.PrefetchScalarGridSpec(
                num_scalar_prefetch=0,
                grid=(B, n_co, n_l),
                in_specs=in_specs,
                out_specs=pl.BlockSpec((1, tco, tl_eff),
                                       lambda b, co, l: (b, co, l)),
            ),
            compiler_params=pltpu.CompilerParams(
                dimension_semantics=("parallel", "parallel", "parallel"),
                vmem_limit_bytes=vmem_limit),
            cost_estimate=cost,
        )(*inputs)

    try:
        out = _call(True)
    except Exception:
        # Single-buffering the resident weight tile is a pure VMEM optimization;
        # fall back to default buffering if this jax/Mosaic build rejects it.
        out = _call(False)

    # Trim C_out / L_out padding added for lane-dense tiling.
    return out[:, :C_out, :L_out]


def _reference_conv1d(x, weight, bias):
    out = jax.lax.conv_general_dilated(
        x.astype(jnp.float32), weight.astype(jnp.float32),
        window_strides=(1,), padding="VALID",
        dimension_numbers=("NCH", "OIH", "NCH"),
        precision=jax.lax.Precision.HIGHEST)
    return out + bias.astype(jnp.float32)[None, :, None]


if __name__ == "__main__":
    key = jax.random.PRNGKey(0)
    k_x, k_w, k_b, k_g, k_x3, k_w3, k_b3 = jax.random.split(key, 7)

    # --- small-C_in shapes (fused im2col path) --------------------------------
    B, C_in, C_out, L, K = 2, 4, 8, 16, 3
    x = jax.random.normal(k_x, (B, C_in, L), dtype=jnp.float32)
    fan_in = C_in * K
    bound = 1.0 / math.sqrt(fan_in)
    weight_v = jax.random.uniform(k_w, (C_out, C_in, K),
                                  minval=-bound, maxval=bound, dtype=jnp.float32)
    bias = jax.random.uniform(k_b, (C_out,),
                              minval=-bound, maxval=bound, dtype=jnp.float32)
    # Non-trivial weight-norm gain (g != ||v||) so the reparametrization is
    # actually exercised, unlike torch's init-time identity.
    weight_g = jax.random.uniform(k_g, (C_out, 1, 1),
                                  minval=0.5, maxval=1.5, dtype=jnp.float32)

    # 1) norm='weight_norm', exact f32 compute -> tight tolerance.
    y = norm_conv1d(x, weight_v, bias, norm="weight_norm", weight_g=weight_g,
                    compute_dtype=jnp.float32)
    y = jax.block_until_ready(y)
    v_norm = jnp.sqrt(jnp.sum(weight_v ** 2, axis=(1, 2), keepdims=True))
    w_eff = weight_g * weight_v / v_norm
    y_ref = _reference_conv1d(x, w_eff, bias)
    assert y.shape == (B, C_out, L - K + 1)
    assert y.dtype == x.dtype
    assert jnp.allclose(y, y_ref, atol=1e-4, rtol=1e-4), \
        float(jnp.max(jnp.abs(y - y_ref)))

    # 2) norm='none', default bf16 MXU operands (f32 accumulation, f32 output).
    y2 = jax.block_until_ready(norm_conv1d(x, weight_v, bias, norm="none"))
    y2_ref = _reference_conv1d(x.astype(jnp.bfloat16),
                               weight_v.astype(jnp.bfloat16), bias)
    assert y2.dtype == jnp.float32
    assert jnp.allclose(y2, y2_ref, atol=1e-3, rtol=1e-3), \
        float(jnp.max(jnp.abs(y2 - y2_ref)))

    # 3) MXU-aligned C_in -> per-tap accumulated-dot path (pltpu.roll, no im2col).
    B3, C_in3, C_out3, L3, K3 = 1, 128, 16, 200, 5
    x3 = jax.random.normal(k_x3, (B3, C_in3, L3), dtype=jnp.float32)
    bound3 = 1.0 / math.sqrt(C_in3 * K3)
    w3 = jax.random.uniform(k_w3, (C_out3, C_in3, K3),
                            minval=-bound3, maxval=bound3, dtype=jnp.float32)
    b3 = jax.random.uniform(k_b3, (C_out3,),
                            minval=-bound3, maxval=bound3, dtype=jnp.float32)
    y3 = jax.block_until_ready(norm_conv1d(x3, w3, b3, norm="none"))
    y3_ref = _reference_conv1d(x3.astype(jnp.bfloat16),
                               w3.astype(jnp.bfloat16), b3)
    assert y3.shape == (B3, C_out3, L3 - K3 + 1)
    assert jnp.allclose(y3, y3_ref, atol=1e-3, rtol=1e-3), \
        float(jnp.max(jnp.abs(y3 - y3_ref)))

    # 4) K == 1 path (no halo input spec).
    y4 = jax.block_until_ready(
        norm_conv1d(x, weight_v[:, :, :1], bias, norm="none",
                    compute_dtype=jnp.float32))
    y4_ref = _reference_conv1d(x, weight_v[:, :, :1], bias)
    assert jnp.allclose(y4, y4_ref, atol=1e-4, rtol=1e-4), \
        float(jnp.max(jnp.abs(y4 - y4_ref)))

    # TODO(synk): causal=True only affects padding done by wrapper modules
    # (StreamableConv1d), not NormConv1d.forward itself, so it is not modeled.
    print("KERNEL_OK")
</pallas_src>

<mosaic_0001>
module attributes {stable_mosaic.version = 11 : i64} {
  func.func @_conv1d_kernel(%arg0: i32, %arg1: i32, %arg2: i32, %arg3: memref<1x4x128xf32, #tpu.memory_space<vmem>>, %arg4: memref<1x4x128xf32, #tpu.memory_space<vmem>>, %arg5: memref<8x12xf32, #tpu.memory_space<vmem>>, %arg6: memref<8x1xf32, #tpu.memory_space<vmem>>, %arg7: memref<1x8x128xf32, #tpu.memory_space<vmem>>) attributes {dimension_semantics = [#tpu.dimension_semantics<parallel>, #tpu.dimension_semantics<parallel>, #tpu.dimension_semantics<parallel>], iteration_bounds = array<i64: 2, 1, 1>, scalar_prefetch = 0 : i64, scratch_operands = 0 : i64, tpu.core_type = #tpu.core_type<tc>, window_params = [{transform_indices = @transform_0, window_bounds = array<i64: 1, 4, 128>}, {transform_indices = @transform_1, window_bounds = array<i64: 1, 4, 128>}, {pipeline_mode = #tpu.pipeline_mode<synchronous>, transform_indices = @transform_2, window_bounds = array<i64: 8, 12>}, {pipeline_mode = #tpu.pipeline_mode<synchronous>, transform_indices = @transform_3, window_bounds = array<i64: 8, 1>}, {transform_indices = @transform_4, window_bounds = array<i64: 1, 8, 128>}]} {
    %c0 = arith.constant 0 : index
    %c0_0 = arith.constant 0 : index
    %c0_1 = arith.constant 0 : index
    %0 = vector.load %arg3[%c0, %c0_0, %c0_1] : memref<1x4x128xf32, #tpu.memory_space<vmem>>, vector<1x4x128xf32>
    %1 = vector.shape_cast %0 : vector<1x4x128xf32> to vector<4x128xf32>
    %c0_2 = arith.constant 0 : index
    %c0_3 = arith.constant 0 : index
    %c0_4 = arith.constant 0 : index
    %2 = vector.load %arg4[%c0_2, %c0_3, %c0_4] : memref<1x4x128xf32, #tpu.memory_space<vmem>>, vector<1x4x128xf32>
    %3 = vector.shape_cast %2 : vector<1x4x128xf32> to vector<4x128xf32>
    %4 = tpu.concatenate %1, %3 in 1 : vector<4x128xf32>, vector<4x128xf32> -> vector<4x256xf32>
    %5 = vector.extract_strided_slice %4 {offsets = [0, 0], sizes = [4, 128], strides = [1, 1]} : vector<4x256xf32> to vector<4x128xf32>
    %6 = vector.extract_strided_slice %4 {offsets = [0, 1], sizes = [4, 128], strides = [1, 1]} : vector<4x256xf32> to vector<4x128xf32>
    %7 = vector.extract_strided_slice %4 {offsets = [0, 2], sizes = [4, 128], strides = [1, 1]} : vector<4x256xf32> to vector<4x128xf32>
    %8 = tpu.concatenate %5, %6, %7 in 0 : vector<4x128xf32>, vector<4x128xf32>, vector<4x128xf32> -> vector<12x128xf32>
    %c0_5 = arith.constant 0 : index
    %c0_6 = arith.constant 0 : index
    %9 = vector.load %arg5[%c0_5, %c0_6] : memref<8x12xf32, #tpu.memory_space<vmem>>, vector<8x12xf32>
    %cst = arith.constant dense<0.000000e+00> : vector<8x128xf32>
    %10 = tpu.matmul %9, %8, %cst {dimension_numbers = #tpu.dot_dimension_numbers<[1], [0], [0], [1], [0, 0, 1, 1], [], []>} : vector<8x12xf32>, vector<12x128xf32>, vector<8x128xf32> -> vector<8x128xf32>
    %c0_7 = arith.constant 0 : index
    %c0_8 = arith.constant 0 : index
    %11 = vector.load %arg6[%c0_7, %c0_8] : memref<8x1xf32, #tpu.memory_space<vmem>>, vector<8x1xf32>
    %12 = vector.broadcast %11 : vector<8x1xf32> to vector<8x128xf32>
    %13 = arith.addf %10, %12 : vector<8x128xf32>
    %c0_9 = arith.constant 0 : index
    %c0_10 = arith.constant 0 : index
    %c0_11 = arith.constant 0 : index
    %14 = vector.load %arg7[%c0_9, %c0_10, %c0_11] : memref<1x8x128xf32, #tpu.memory_space<vmem>>, vector<1x8x128xf32>
    %15 = vector.shape_cast %14 : vector<1x8x128xf32> to vector<8x128xf32>
    %16 = vector.shape_cast %13 : vector<8x128xf32> to vector<1x8x128xf32>
    tpu.vector_store %arg7[%c0_9, %c0_10, %c0_11], %16 {strides = array<i32>} : memref<1x8x128xf32, #tpu.memory_space<vmem>>, vector<1x8x128xf32>,
    return
  }
  func.func @transform_0(%arg0: i32, %arg1: i32, %arg2: i32) -> (i32, i32, i32) {
    %c0_i32 = arith.constant 0 : i32
    %c0_i32_0 = arith.constant 0 : i32
    return %arg0, %c0_i32, %arg2 : i32, i32, i32
  }
  func.func @transform_1(%arg0: i32, %arg1: i32, %arg2: i32) -> (i32, i32, i32) {
    %c1_i32 = arith.constant 1 : i32
    %0 = arith.addi %arg2, %c1_i32 : i32
    %c1_i32_0 = arith.constant 1 : i32
    %1 = arith.muli %0, %c1_i32_0 : i32
    %c0_i32 = arith.constant 0 : i32
    %c0_i32_1 = arith.constant 0 : i32
    return %arg0, %c0_i32, %1 : i32, i32, i32
  }
  func.func @transform_2(%arg0: i32, %arg1: i32, %arg2: i32) -> (i32, i32) {
    %c0_i32 = arith.constant 0 : i32
    %c0_i32_0 = arith.constant 0 : i32
    return %arg1, %c0_i32 : i32, i32
  }
  func.func @transform_3(%arg0: i32, %arg1: i32, %arg2: i32) -> (i32, i32) {
    %c0_i32 = arith.constant 0 : i32
    %c0_i32_0 = arith.constant 0 : i32
    return %arg1, %c0_i32 : i32, i32
  }
  func.func @transform_4(%arg0: i32, %arg1: i32, %arg2: i32) -> (i32, i32, i32) {
    %c0_i32 = arith.constant 0 : i32
    return %arg0, %arg1, %arg2 : i32, i32, i32
  }
}

module attributes {stable_mosaic.version = 11 : i64} {
  func.func @_conv1d_kernel(%arg0: i32, %arg1: i32, %arg2: i32, %arg3: memref<1x4x128xf32, #tpu.memory_space<vmem>>, %arg4: memref<1x4x128xf32, #tpu.memory_space<vmem>>, %arg5: memref<8x12xf32, #tpu.memory_space<vmem>>, %arg6: memref<8x1xf32, #tpu.memory_space<vmem>>, %arg7: memref<1x8x128xf32, #tpu.memory_space<vmem>>) attributes {dimension_semantics = [#tpu.dimension_semantics<parallel>, #tpu.dimension_semantics<parallel>, #tpu.dimension_semantics<parallel>], iteration_bounds = array<i64: 2, 1, 1>, scalar_prefetch = 0 : i64, scratch_operands = 0 : i64, tpu.core_type = #tpu.core_type<tc>, window_params = [{transform_indices = @transform_0, window_bounds = array<i64: 1, 4, 128>}, {transform_indices = @transform_1, window_bounds = array<i64: 1, 4, 128>}, {transform_indices = @transform_2, window_bounds = array<i64: 8, 12>}, {transform_indices = @transform_3, window_bounds = array<i64: 8, 1>}, {transform_indices = @transform_4, window_bounds = array<i64: 1, 8, 128>}]} {
    %c0 = arith.constant 0 : index
    %c0_0 = arith.constant 0 : index
    %c0_1 = arith.constant 0 : index
    %0 = vector.load %arg3[%c0, %c0_0, %c0_1] : memref<1x4x128xf32, #tpu.memory_space<vmem>>, vector<1x4x128xf32>
    %1 = vector.shape_cast %0 : vector<1x4x128xf32> to vector<4x128xf32>
    %c0_2 = arith.constant 0 : index
    %c0_3 = arith.constant 0 : index
    %c0_4 = arith.constant 0 : index
    %2 = vector.load %arg4[%c0_2, %c0_3, %c0_4] : memref<1x4x128xf32, #tpu.memory_space<vmem>>, vector<1x4x128xf32>
    %3 = vector.shape_cast %2 : vector<1x4x128xf32> to vector<4x128xf32>
    %4 = tpu.concatenate %1, %3 in 1 : vector<4x128xf32>, vector<4x128xf32> -> vector<4x256xf32>
    %5 = vector.extract_strided_slice %4 {offsets = [0, 0], sizes = [4, 128], strides = [1, 1]} : vector<4x256xf32> to vector<4x128xf32>
    %6 = vector.extract_strided_slice %4 {offsets = [0, 1], sizes = [4, 128], strides = [1, 1]} : vector<4x256xf32> to vector<4x128xf32>
    %7 = vector.extract_strided_slice %4 {offsets = [0, 2], sizes = [4, 128], strides = [1, 1]} : vector<4x256xf32> to vector<4x128xf32>
    %8 = tpu.concatenate %5, %6, %7 in 0 : vector<4x128xf32>, vector<4x128xf32>, vector<4x128xf32> -> vector<12x128xf32>
    %c0_5 = arith.constant 0 : index
    %c0_6 = arith.constant 0 : index
    %9 = vector.load %arg5[%c0_5, %c0_6] : memref<8x12xf32, #tpu.memory_space<vmem>>, vector<8x12xf32>
    %cst = arith.constant dense<0.000000e+00> : vector<8x128xf32>
    %10 = tpu.matmul %9, %8, %cst {dimension_numbers = #tpu.dot_dimension_numbers<[1], [0], [0], [1], [0, 0, 1, 1], [], []>} : vector<8x12xf32>, vector<12x128xf32>, vector<8x128xf32> -> vector<8x128xf32>
    %c0_7 = arith.constant 0 : index
    %c0_8 = arith.constant 0 : index
    %11 = vector.load %arg6[%c0_7, %c0_8] : memref<8x1xf32, #tpu.memory_space<vmem>>, vector<8x1xf32>
    %12 = vector.broadcast %11 : vector<8x1xf32> to vector<8x128xf32>
    %13 = arith.addf %10, %12 : vector<8x128xf32>
    %c0_9 = arith.constant 0 : index
    %c0_10 = arith.constant 0 : index
    %c0_11 = arith.constant 0 : index
    %14 = vector.load %arg7[%c0_9, %c0_10, %c0_11] : memref<1x8x128xf32, #tpu.memory_space<vmem>>, vector<1x8x128xf32>
    %15 = vector.shape_cast %14 : vector<1x8x128xf32> to vector<8x128xf32>
    %16 = vector.shape_cast %13 : vector<8x128xf32> to vector<1x8x128xf32>
    tpu.vector_store %arg7[%c0_9, %c0_10, %c0_11], %16 {strides = array<i32>} : memref<1x8x128xf32, #tpu.memory_space<vmem>>, vector<1x8x128xf32>,
    return
  }
  func.func @transform_0(%arg0: i32, %arg1: i32, %arg2: i32) -> (i32, i32, i32) {
    %c0_i32 = arith.constant 0 : i32
    %c0_i32_0 = arith.constant 0 : i32
    return %arg0, %c0_i32, %arg2 : i32, i32, i32
  }
  func.func @transform_1(%arg0: i32, %arg1: i32, %arg2: i32) -> (i32, i32, i32) {
    %c1_i32 = arith.constant 1 : i32
    %0 = arith.addi %arg2, %c1_i32 : i32
    %c1_i32_0 = arith.constant 1 : i32
    %1 = arith.muli %0, %c1_i32_0 : i32
    %c0_i32 = arith.constant 0 : i32
    %c0_i32_1 = arith.constant 0 : i32
    return %arg0, %c0_i32, %1 : i32, i32, i32
  }
  func.func @transform_2(%arg0: i32, %arg1: i32, %arg2: i32) -> (i32, i32) {
    %c0_i32 = arith.constant 0 : i32
    %c0_i32_0 = arith.constant 0 : i32
    return %arg1, %c0_i32 : i32, i32
  }
  func.func @transform_3(%arg0: i32, %arg1: i32, %arg2: i32) -> (i32, i32) {
    %c0_i32 = arith.constant 0 : i32
    %c0_i32_0 = arith.constant 0 : i32
    return %arg1, %c0_i32 : i32, i32
  }
  func.func @transform_4(%arg0: i32, %arg1: i32, %arg2: i32) -> (i32, i32, i32) {
    %c0_i32 = arith.constant 0 : i32
    return %arg0, %arg1, %arg2 : i32, i32, i32
  }
}

</mosaic_0001>

<llo_original>
// kernel: tpu_custom_call.1
$region0: #{tpu_custom_call.1}
  #allocation0 [shape = 'u32[]', space=smem, size = 0x4, offset = 0x4, fixed_abs, tag = 'smem constant byte address 0x4 - core index']
  #allocation1 [shape = 'u32[144,128]{1,0:T(1,128)}', space=vmem, size = 0x12000, scoped, tag = 'internal scratch']
  %s0 = inlined_call_operand.hbm [shape: f32[2,4,256], index: 0, kind: input, shape index: {}]
  %s1 = inlined_call_operand.hbm [shape: f32[2,4,256], index: 1, kind: input, shape index: {}]
  %s2 = inlined_call_operand.vmem [shape: f32[8,12], index: 2, kind: input, shape index: {}]
  %s3 = inlined_call_operand.vmem [shape: f32[8,1], index: 3, kind: input, shape index: {}]
  %s4 = inlined_call_operand.hbm [shape: f32[2,8,128], index: 4, kind: output, shape index: {}]
  %s5 = sld [smem:[#allocation0]]
  $region57: #{tpu_custom_call.1} parent=0
    _
  %s7 = ssub.s32 1, %s5
  %s8 = scalar_select 0, %s7, %s5
  $region1: #{tpu_custom_call.1} parent=0
    #allocation2 [shape = 'u8[4096]{0}', space=vmem, size = 0x1000, scoped, tag = 'input window, operand 0']
    #allocation3 [shape = 's32[2]{0}', space=sflag, size = 0x8, scoped, tag = 'scoped memory for tpu_custom_call.1']
    #allocation4 [shape = 's32[2]{0}', space=sflag, size = 0x8, scoped, tag = 'scoped memory for tpu_custom_call.1']
    #allocation5 [shape = 'u8[4096]{0}', space=vmem, size = 0x1000, scoped, tag = 'input window, operand 1']
    #allocation6 [shape = 's32[2]{0}', space=sflag, size = 0x8, scoped, tag = 'scoped memory for tpu_custom_call.1']
    #allocation7 [shape = 'u8[8192]{0}', space=vmem, size = 0x2000, scoped, tag = 'output window, operand 0']
    %9 = vsyncpa [#allocation3], 0
    %s10 = scalar_lea.sflag [#allocation3], 1
    %11 = vsyncpa %s10, 0
    %12 = vsyncpa [#allocation6], 0
    %s13 = scalar_lea.sflag [#allocation6], 1
    %14 = vsyncpa %s13, 0
    %15 = vsyncpa [#allocation4], 0
    %s16 = scalar_lea.sflag [#allocation4], 1
    %17 = vsyncpa %s16, 0
    loop: start=0, step=1, limit=4
    $region2: #{tpu_custom_call.1} parent=1 // loop_pre_header
      _
    $region3: #{tpu_custom_call.1} parent=1 // loop_header
      %s19 = sphi 0, %s23
      %p20 = scmp.ge.s32.totalorder %s19, 4
      %s26 = sphi 0, %s45
      %s27 = sphi 0, %s41
      %s28 = sphi 0, %s37
      %s29 = sphi 0, %s26
      %s30 = sphi 0, %s27
      %s31 = sphi 0, %s28
      %s32 = sphi 0, %s29
      %s33 = sphi 0, %s30
      %s34 = sphi 0, %s31
      %s50 = sphi 0, %s52
      %s53 = sphi 0, %s50
      %s54 = sphi 0, %s53
      %s70 = sphi 0, %s54
      %s80 = sphi 0, %s82
      %s83 = sphi 0, %s80
      %s84 = sphi 0, %s83
      %s100 = sphi 0, %s84
      %s106 = sphi 0, %s108
      %s109 = sphi 0, %s106
      %s110 = sphi 0, %s109
      %s126 = sphi 0, %s110
      %s132 = sphi 0, %s134
      %s135 = sphi 0, %s132
      %s136 = sphi 0, %s135
      %s152 = sphi 0, %s136
      %s162 = sphi 0, %s164
      %s165 = sphi 0, %s162
      %s166 = sphi 0, %s165
      %s182 = sphi 0, %s166
    $region4: #{tpu_custom_call.1} parent=1 // loop_header_branch
      %22 = sbr.rel (%p20) target = $region8
    $region5: #{tpu_custom_call.1} parent=1 // loop_body
      %s24 = ssub.s32 %s19, 1
      %s25 = ssub.s32 %s19, 2
      %s35 = sadd.s32 1, %s28
      %p36 = scmp.ge.s32.totalorder %s35, 1
      %s37 = scalar_select %p36, 0, %s35
      %s38 = sadd.s32 1, %s27
      %s39 = scalar_select %p36, %s38, %s27
      %p40 = scmp.ge.s32.totalorder %s39, 1
      %s41 = scalar_select %p40, 0, %s39
      %s42 = sadd.s32 1, %s26
      %s43 = scalar_select %p40, %s42, %s26
      %p44 = scmp.ge.s32.totalorder %s43, 2
      %s45 = scalar_select %p44, 0, %s43
      %s46 = ssub.s32 %s26, %s45
      %s47 = ssub.s32 %s28, %s37
      %s48 = sor.u32 %s46, %s47
      %p49 = scmp.eq.s32.totalorder %s48, 0
      %s51 = sadd.s32 %s50, 1
      %s52 = scalar_select %p49, %s50, %s51
      %p55 = pneg %p49
      %p56 = scmp.eq.s32.totalorder %s19, 1
      %p57 = por %p55, %p56
      %p58 = scmp.ne.s32.totalorder %s50, %s53
      %p59 = scmp.eq.s32.totalorder %s19, 0
      %p60 = por %p58, %p59
      %p61 = scmp.ne.s32.totalorder %s50, %s53
      %p62 = scmp.eq.s32.totalorder %s24, 1
      %p63 = por %p61, %p62
      %p64 = scmp.ne.s32.totalorder %s53, %s54
      %p65 = scmp.eq.s32.totalorder %s24, 0
      %p66 = por %p64, %p65
      %p67 = scmp.ne.s32.totalorder %s53, %s54
      %p68 = scmp.eq.s32.totalorder %s25, 1
      %p69 = por %p67, %p68
      %p71 = scmp.ne.s32.totalorder %s54, %s70
      %p72 = scmp.eq.s32.totalorder %s25, 0
      %p73 = por %p71, %p72
      %s74 = sadd.s32 %s28, 1
      %s75 = sadd.s32 %s37, 1
      %s76 = ssub.s32 %s26, %s45
      %s77 = ssub.s32 %s74, %s75
      %s78 = sor.u32 %s76, %s77
      %p79 = scmp.eq.s32.totalorder %s78, 0
      %s81 = sadd.s32 %s80, 1
      %s82 = scalar_select %p79, %s80, %s81
      %p85 = pneg %p79
      %p86 = scmp.eq.s32.totalorder %s19, 1
      %p87 = por %p85, %p86
      %p88 = scmp.ne.s32.totalorder %s80, %s83
      %p89 = scmp.eq.s32.totalorder %s19, 0
      %p90 = por %p88, %p89
      %p91 = scmp.ne.s32.totalorder %s80, %s83
      %p92 = scmp.eq.s32.totalorder %s24, 1
      %p93 = por %p91, %p92
      %p94 = scmp.ne.s32.totalorder %s83, %s84
      %p95 = scmp.eq.s32.totalorder %s24, 0
      %p96 = por %p94, %p95
      %p97 = scmp.ne.s32.totalorder %s83, %s84
      %p98 = scmp.eq.s32.totalorder %s25, 1
      %p99 = por %p97, %p98
      %p101 = scmp.ne.s32.totalorder %s84, %s100
      %p102 = scmp.eq.s32.totalorder %s25, 0
      %p103 = por %p101, %p102
      %s104 = ssub.s32 %s27, %s41
      %p105 = scmp.eq.s32.totalorder %s104, 0
      %s107 = sadd.s32 %s106, 1
      %s108 = scalar_select %p105, %s106, %s107
      %p111 = pneg %p105
      %p112 = scmp.eq.s32.totalorder %s19, 1
      %p113 = por %p111, %p112
      %p114 = scmp.ne.s32.totalorder %s106, %s109
      %p115 = scmp.eq.s32.totalorder %s19, 0
      %p116 = por %p114, %p115
      %p117 = scmp.ne.s32.totalorder %s106, %s109
      %p118 = scmp.eq.s32.totalorder %s24, 1
      %p119 = por %p117, %p118
      %p120 = scmp.ne.s32.totalorder %s109, %s110
      %p121 = scmp.eq.s32.totalorder %s24, 0
      %p122 = por %p120, %p121
      %p123 = scmp.ne.s32.totalorder %s109, %s110
      %p124 = scmp.eq.s32.totalorder %s25, 1
      %p125 = por %p123, %p124
      %p127 = scmp.ne.s32.totalorder %s110, %s126
      %p128 = scmp.eq.s32.totalorder %s25, 0
      %p129 = por %p127, %p128
      %s130 = ssub.s32 %s27, %s41
      %p131 = scmp.eq.s32.totalorder %s130, 0
      %s133 = sadd.s32 %s132, 1
      %s134 = scalar_select %p131, %s132, %s133
      %p137 = pneg %p131
      %p138 = scmp.eq.s32.totalorder %s19, 1
      %p139 = por %p137, %p138
      %p140 = scmp.ne.s32.totalorder %s132, %s135
      %p141 = scmp.eq.s32.totalorder %s19, 0
      %p142 = por %p140, %p141
      %p143 = scmp.ne.s32.totalorder %s132, %s135
      %p144 = scmp.eq.s32.totalorder %s24, 1
      %p145 = por %p143, %p144
      %p146 = scmp.ne.s32.totalorder %s135, %s136
      %p147 = scmp.eq.s32.totalorder %s24, 0
      %p148 = por %p146, %p147
      %p149 = scmp.ne.s32.totalorder %s135, %s136
      %p150 = scmp.eq.s32.totalorder %s25, 1
      %p151 = por %p149, %p150
      %p153 = scmp.ne.s32.totalorder %s136, %s152
      %p154 = scmp.eq.s32.totalorder %s25, 0
      %p155 = por %p153, %p154
      %s156 = ssub.s32 %s26, %s45
      %s157 = ssub.s32 %s27, %s41
      %s158 = sor.u32 %s156, %s157
      %s159 = ssub.s32 %s28, %s37
      %s160 = sor.u32 %s158, %s159
      %p161 = scmp.eq.s32.totalorder %s160, 0
      %s163 = sadd.s32 %s162, 1
      %s164 = scalar_select %p161, %s162, %s163
      %p167 = pneg %p161
      %p168 = scmp.eq.s32.totalorder %s19, 1
      %p169 = por %p167, %p168
      %p170 = scmp.ne.s32.totalorder %s162, %s165
      %p171 = scmp.eq.s32.totalorder %s19, 0
      %p172 = por %p170, %p171
      %p173 = scmp.ne.s32.totalorder %s162, %s165
      %p174 = scmp.eq.s32.totalorder %s24, 1
      %p175 = por %p173, %p174
      %p176 = scmp.ne.s32.totalorder %s165, %s166
      %p177 = scmp.eq.s32.totalorder %s24, 0
      %p178 = por %p176, %p177
      %p179 = scmp.ne.s32.totalorder %s165, %s166
      %p180 = scmp.eq.s32.totalorder %s25, 1
      %p181 = por %p179, %p180
      %p183 = scmp.ne.s32.totalorder %s166, %s182
      %p184 = scmp.eq.s32.totalorder %s25, 0
      %p185 = por %p183, %p184
      %p186 = scmp.le.s32.totalorder 1, %s19
      %p187 = scmp.lt.s32.totalorder %s19, 3
      %p188 = pnand %p186, %p187
      %p189 = pneg %p188
      // Predicated region
      $region9: #{tpu_custom_call.1} parent=5 // pred_check
        _
      $region10: #{tpu_custom_call.1} parent=5 // pred_check_branch
        %191 = sbr.rel (%p188) target = $region12
      $region11: #{tpu_custom_call.1} parent=5 // pred_region
        %s192 = ssub.s32 %s19, 1
        // Predicated region
        $region13: #{tpu_custom_call.1} parent=11 // pred_check
          %p193 = pneg %p122
        $region14: #{tpu_custom_call.1} parent=11 // pred_check_branch
          %195 = sbr.rel (%p193) target = $region16
        $region15: #{tpu_custom_call.1} parent=11 // pred_region
          %p196 = scmp.lt.s32.totalorder %s30, 0
          %s197 = scalar_select %p196, %s30, 0
          %s198 = smul.addr %s197, 8
          %s199 = scalar_lea.vmem %s2, %s198
        $region16: #{tpu_custom_call.1} parent=11 // pred_fallthru
          _
        // Predicated region
        $region17: #{tpu_custom_call.1} parent=11 // pred_check
          %p200 = pneg %p148
        $region18: #{tpu_custom_call.1} parent=11 // pred_check_branch
          %202 = sbr.rel (%p200) target = $region20
        $region19: #{tpu_custom_call.1} parent=11 // pred_region
          %p203 = scmp.lt.s32.totalorder %s30, 0
          %s204 = scalar_select %p203, %s30, 0
          %s205 = smul.addr %s204, 8
          %s206 = scalar_lea.vmem %s3, %s205
        $region20: #{tpu_custom_call.1} parent=11 // pred_fallthru
          _
      $region12: #{tpu_custom_call.1} parent=5 // pred_fallthru
        _
      %p207 = scmp.lt.s32.totalorder %s19, 2
      // Predicated region
      $region21: #{tpu_custom_call.1} parent=5 // pred_check
        %p208 = pneg %p207
      $region22: #{tpu_custom_call.1} parent=5 // pred_check_branch
        %210 = sbr.rel (%p208) target = $region24
      $region23: #{tpu_custom_call.1} parent=5 // pred_region
        // Predicated region
        $region25: #{tpu_custom_call.1} parent=23 // pred_check
          %p211 = pneg %p60
        $region26: #{tpu_custom_call.1} parent=23 // pred_check_branch
          %213 = sbr.rel (%p211) target = $region28
        $region27: #{tpu_custom_call.1} parent=23 // pred_region
          %s214 = sand.u32 %s50, 1
          %s215 = scalar_lea.sflag [#allocation3], %s214
          %s216 = sand.u32 %s50, 1
          %s217 = smul.addr %s216, 4
          %s218 = scalar_lea.vmem [#allocation2], %s217
          %s220 = ssub.s32 64, 64
          %221 = vsyncadd %s215, %s220
          %s222 = smul.addr %s26, 2
          %s223 = sadd.s32 %s28, %s222
          %s224 = smul.addr %s223, 64
          %s225 = scalar_lea.hbm %s0, %s224
          %s227 = sshll.u32 %s218, 4
          %s228 = int_to_ptr.vmem [resolvable:$true] %s227
          %230 = dma.hbm_to_vmem [thread:$0]  %s225, 64, %s228, %s215
        $region28: #{tpu_custom_call.1} parent=23 // pred_fallthru
          _
        // Predicated region
        $region29: #{tpu_custom_call.1} parent=23 // pred_check
          %p231 = pneg %p90
        $region30: #{tpu_custom_call.1} parent=23 // pred_check_branch
          %233 = sbr.rel (%p231) target = $region32
        $region31: #{tpu_custom_call.1} parent=23 // pred_region
          %s234 = sand.u32 %s80, 1
          %s235 = scalar_lea.sflag [#allocation6], %s234
          %s236 = sand.u32 %s80, 1
          %s237 = smul.addr %s236, 4
          %s238 = scalar_lea.vmem [#allocation5], %s237
          %s239 = sadd.s32 %s28, 1
          %s241 = ssub.s32 64, 64
          %242 = vsyncadd %s235, %s241
          %s243 = smul.addr %s26, 2
          %s244 = sadd.s32 %s239, %s243
          %s245 = smul.addr %s244, 64
          %s246 = scalar_lea.hbm %s1, %s245
          %s248 = sshll.u32 %s238, 4
          %s249 = int_to_ptr.vmem [resolvable:$true] %s248
          %251 = dma.hbm_to_vmem [thread:$0]  %s246, 64, %s249, %s235
        $region32: #{tpu_custom_call.1} parent=23 // pred_fallthru
          _
      $region24: #{tpu_custom_call.1} parent=5 // pred_fallthru
        _
      %p252 = scmp.le.s32.totalorder 1, %s19
      %p253 = scmp.lt.s32.totalorder %s19, 3
      %p254 = pnand %p252, %p253
      %p255 = pneg %p254
      // Predicated region
      $region33: #{tpu_custom_call.1} parent=5 // pred_check
        _
      $region34: #{tpu_custom_call.1} parent=5 // pred_check_branch
        %257 = sbr.rel (%p254) target = $region36
      $region35: #{tpu_custom_call.1} parent=5 // pred_region
        %s258 = ssub.s32 %s19, 1
        %s259 = sand.u32 %s53, 1
        %s260 = scalar_lea.sflag [#allocation3], %s259
        %s261 = sand.u32 %s53, 1
        %s262 = smul.addr %s261, 4
        %s263 = scalar_lea.vmem [#allocation2], %s262
        // Predicated region
        $region37: #{tpu_custom_call.1} parent=35 // pred_check
          %p264 = pneg %p66
        $region38: #{tpu_custom_call.1} parent=35 // pred_check_branch
          %266 = sbr.rel (%p264) target = $region40
        $region39: #{tpu_custom_call.1} parent=35 // pred_region
          %267 = dma.done %s260, 64
        $region40: #{tpu_custom_call.1} parent=35 // pred_fallthru
          _
        %s268 = sand.u32 %s83, 1
        %s269 = scalar_lea.sflag [#allocation6], %s268
        %s270 = sand.u32 %s83, 1
        %s271 = smul.addr %s270, 4
        %s272 = scalar_lea.vmem [#allocation5], %s271
        // Predicated region
        $region41: #{tpu_custom_call.1} parent=35 // pred_check
          %p273 = pneg %p96
        $region42: #{tpu_custom_call.1} parent=35 // pred_check_branch
          %275 = sbr.rel (%p273) target = $region44
        $region43: #{tpu_custom_call.1} parent=35 // pred_region
          %276 = dma.done %s269, 64
        $region44: #{tpu_custom_call.1} parent=35 // pred_fallthru
          _
        %s277 = sand.u32 %s53, 1
        %s278 = scalar_lea.sflag [#allocation3], %s277
        %s279 = sand.u32 %s53, 1
        %s280 = smul.addr %s279, 4
        %s281 = scalar_lea.vmem [#allocation2], %s280
        %p282 = pneg %p66
        %p283 = pneg %p63
        %s284 = sand.u32 %s83, 1
        %s285 = scalar_lea.sflag [#allocation6], %s284
        %s286 = sand.u32 %s83, 1
        %s287 = smul.addr %s286, 4
        %s288 = scalar_lea.vmem [#allocation5], %s287
        %p289 = pneg %p96
        %p290 = pneg %p93
        %p291 = scmp.lt.s32.totalorder %s30, 0
        %s292 = scalar_select %p291, %s30, 0
        %s293 = smul.addr %s292, 8
        %s294 = scalar_lea.vmem %s2, %s293
        %p295 = pneg %p122
        %p296 = pneg %p119
        %p297 = scmp.lt.s32.totalorder %s30, 0
        %s298 = scalar_select %p297, %s30, 0
        %s299 = smul.addr %s298, 8
        %s300 = scalar_lea.vmem %s3, %s299
        %p301 = pneg %p148
        %p302 = pneg %p145
        %p303 = pneg %p178
        %p304 = pneg %p175
        %s305 = sand.u32 %s165, 1
        %s306 = scalar_lea.sflag [#allocation4], %s305
        %s307 = sand.u32 %s165, 1
        %s308 = smul.addr %s307, 8
        %s309 = scalar_lea.vmem [#allocation7], %s308
        %s310 = sadd.s32 %s31, 1
        %p311 = scmp.lt.s32.totalorder %s30, 0
        %s312 = scalar_select %p311, %s30, 0
        %s313 = smul.addr %s312, 8
        %s314 = scalar_lea.vmem %s2, %s313
        %p315 = scmp.lt.s32.totalorder %s30, 0
        %s316 = scalar_select %p315, %s30, 0
        %s317 = smul.addr %s316, 8
        %s318 = scalar_lea.vmem %s3, %s317
        %v319 = vld [vmem:[%s263] sm:$0xf]
        %v320 = vld [vmem:[%s272] sm:$0xf]
        %v323 = vrot.slane %v319, 4
        %v324 = vrot.slane %v320, 4
        %325 = vrot.lane.b32.xlu0 %v323, 127
        %v326 = vpop.permute.xlu0 %325
        %327 = vrot.lane.b32.xlu0 %v324, 127
        %v328 = vpop.permute.xlu0 %327
        %vm329 = vcmask 1039360
        %v330 = vsel %vm329, %v326, %v328
        %332 = vrot.lane.b32.xlu0 %v319, 126
        %v333 = vpop.permute.xlu0 %332
        %334 = vrot.lane.b32.xlu0 %v320, 126
        %v335 = vpop.permute.xlu0 %334
        %vm336 = vcmask 1031168
        %v337 = vsel %vm336, %v333, %v335
        %vm338 = vcmask 1043456
        %v339 = vsel %vm338, %v319, %v330
        %v340 = vld [vmem:[%s314] sm:$0xff]
        %v341 = vld [vmem:[%s318] sm:$0xff]
        %343 = vset.pattern.permute.xlu0 0
        %344 = vperm.xlu0 %343, %v341
        %v345 = vpop.permute.xlu0 %344
        %vm347 = vcmask 97280
        %v349 = vsel %vm347, %v340, 0
        %v351 = vsel %vm338, %v337, 0
        %353 = vmatprep.subr.mxu0 0.0
        %354 = vmatpush1.msra.mxu0 %v339
        %355 = vmatprep.subr.mxu0 0.0
        %356 = vmatpush1.msra.mxu0 %v351
        %357 = vmatprep.subr.mxu0 0.0
        %358 = vmatpush1.msra.mxu0 0.0
        %359 = vmatprep.subr.mxu0 0.0
        %360 = vmatpush1.msra.mxu0 0.0
        %361 = vmatprep.subr.mxu0 0.0
        %362 = vmatpush1.msra.mxu0 0.0
        %363 = vmatprep.subr.mxu0 0.0
        %364 = vmatpush1.msra.mxu0 0.0
        %365 = vmatprep.subr.mxu0 0.0
        %366 = vmatpush1.msra.mxu0 0.0
        %367 = vmatprep.subr.mxu0 0.0
        %368 = vmatpush1.msra.mxu0 0.0
        %369 = vmatprep.subr.mxu0 0.0
        %370 = vmatpush1.msra.mxu0 0.0
        %371 = vmatprep.subr.mxu0 0.0
        %372 = vmatpush1.msra.mxu0 0.0
        %373 = vmatprep.subr.mxu0 0.0
        %374 = vmatpush1.msra.mxu0 0.0
        %375 = vmatprep.subr.mxu0 0.0
        %376 = vmatpush1.msra.mxu0 0.0
        %377 = vmatprep.subr.mxu0 0.0
        %378 = vmatpush1.msra.mxu0 0.0
        %379 = vmatprep.subr.mxu0 0.0
        %380 = vmatpush1.msra.mxu0 0.0
        %381 = vmatprep.subr.mxu0 0.0
        %382 = vmatpush1.msra.mxu0 0.0
        %383 = vmatprep.subr.mxu0 0.0
        %384 = vmatpush1.msra.mxu0 0.0
        %385 = vmatprep.subr.mxu0 0.0
        %386 = vmatpush1.msra.mxu0 0.0
        %387 = vmatprep.subr.mxu0 0.0
        %388 = vmatpush1.msra.mxu0 0.0
        %389 = vmatprep.subr.mxu0 0.0
        %390 = vmatpush1.msra.mxu0 0.0
        %391 = vmatprep.subr.mxu0 0.0
        %392 = vmatpush1.msra.mxu0 0.0
        %393 = vmatprep.subr.mxu0 0.0
        %394 = vmatpush1.msra.mxu0 0.0
        %395 = vmatprep.subr.mxu0 0.0
        %396 = vmatpush1.msra.mxu0 0.0
        %397 = vmatprep.subr.mxu0 0.0
        %398 = vmatpush1.msra.mxu0 0.0
        %399 = vmatprep.subr.mxu0 0.0
        %400 = vmatpush1.msra.mxu0 0.0
        %401 = vmatprep.subr.mxu0 0.0
        %402 = vmatpush1.msra.mxu0 0.0
        %403 = vmatprep.subr.mxu0 0.0
        %404 = vmatpush1.msra.mxu0 0.0
        %405 = vmatprep.subr.mxu0 0.0
        %406 = vmatpush1.msra.mxu0 0.0
        %407 = vmatprep.subr.mxu0 0.0
        %408 = vmatpush1.msra.mxu0 0.0
        %409 = vmatprep.subr.mxu0 0.0
        %410 = vmatpush1.msra.mxu0 0.0
        %411 = vmatprep.subr.mxu0 0.0
        %412 = vmatpush1.msra.mxu0 0.0
        %413 = vmatprep.subr.mxu0 0.0
        %414 = vmatpush1.msra.mxu0 0.0
        %415 = vmatprep.subr.mxu0 0.0
        %416 = vmatpush1.msra.mxu0 0.0
        %417 = vmatprep.mubr.f32.mxu0 0.0
        %418 = vmatmul.mubr.f32.gmra.mrb[0].mxu0 %v349
        %v419 = vpop.f32.mrb[0].mxu0
        %v420 = vadd.f32 %v345, %v419
        %v421 = vpop.f32.mrb[0].mxu0
        %422 = vdwg.mxu0
        %423 = vst [vmem:[%s309] sm:$0xff] %v420
        %s424 = sand.u32 %s165, 1
        %s425 = scalar_lea.sflag [#allocation4], %s424
        %s426 = sand.u32 %s165, 1
        %s427 = smul.addr %s426, 8
        %s428 = scalar_lea.vmem [#allocation7], %s427
        // Predicated region
        $region45: #{tpu_custom_call.1} parent=35 // pred_check
          %p429 = pneg %p175
        $region46: #{tpu_custom_call.1} parent=35 // pred_check_branch
          %431 = sbr.rel (%p429) target = $region48
        $region47: #{tpu_custom_call.1} parent=35 // pred_region
          %s433 = ssub.s32 128, 128
          %434 = vsyncadd %s425, %s433
          %s435 = sadd.s32 %s31, %s30
          %s436 = sadd.s32 %s435, %s29
          %s437 = smul.addr %s436, 128
          %s438 = scalar_lea.hbm %s4, %s437
          %s440 = sshll.u32 %s428, 4
          %s441 = int_to_ptr.vmem [resolvable:$true] %s440
          %443 = dma.vmem_to_hbm [thread:$0]  %s441, 128, %s438, %s425
        $region48: #{tpu_custom_call.1} parent=35 // pred_fallthru
          _
      $region36: #{tpu_custom_call.1} parent=5 // pred_fallthru
        _
      %p444 = scmp.le.s32.totalorder 2, %s19
      // Predicated region
      $region49: #{tpu_custom_call.1} parent=5 // pred_check
        %p445 = pneg %p444
      $region50: #{tpu_custom_call.1} parent=5 // pred_check_branch
        %447 = sbr.rel (%p445) target = $region52
      $region51: #{tpu_custom_call.1} parent=5 // pred_region
        %s448 = ssub.s32 %s19, 2
        // Predicated region
        $region53: #{tpu_custom_call.1} parent=51 // pred_check
          %p449 = pneg %p181
        $region54: #{tpu_custom_call.1} parent=51 // pred_check_branch
          %451 = sbr.rel (%p449) target = $region56
        $region55: #{tpu_custom_call.1} parent=51 // pred_region
          %s452 = sand.u32 %s166, 1
          %s453 = scalar_lea.sflag [#allocation4], %s452
          %s454 = sand.u32 %s166, 1
          %s455 = smul.addr %s454, 8
          %s456 = scalar_lea.vmem [#allocation7], %s455
          %457 = dma.done %s453, 128
        $region56: #{tpu_custom_call.1} parent=51 // pred_fallthru
          _
      $region52: #{tpu_custom_call.1} parent=5 // pred_fallthru
        _
    $region6: #{tpu_custom_call.1} parent=1 // loop_footer
      %s23 = sadd.s32 1, %s19
    $region7: #{tpu_custom_call.1} parent=1 // loop_footer_branch
      %18 = sbr.rel target = $region3
    $region8: #{tpu_custom_call.1} parent=1 // loop_exit
      _
    %458 = vsyncpa [#allocation3], 1
    %s459 = scalar_lea.sflag [#allocation3], 1
    %460 = vsyncpa %s459, 1
    %461 = vsyncpa [#allocation6], 1
    %s462 = scalar_lea.sflag [#allocation6], 1
    %463 = vsyncpa %s462, 1
    %464 = vsyncpa [#allocation4], 1
    %s465 = scalar_lea.sflag [#allocation4], 1
    %466 = vsyncpa %s465, 1

// kernel: tpu_custom_call.1
$region0: #{tpu_custom_call.1}
  #allocation0 [shape = 'u32[]', space=smem, size = 0x4, offset = 0x4, fixed_abs, tag = 'smem constant byte address 0x4 - core index']
  #allocation1 [shape = 'u32[144,128]{1,0:T(1,128)}', space=vmem, size = 0x12000, scoped, tag = 'internal scratch']
  %s0 = inlined_call_operand.hbm [shape: f32[2,4,256], index: 0, kind: input, shape index: {}]
  %s1 = inlined_call_operand.hbm [shape: f32[2,4,256], index: 1, kind: input, shape index: {}]
  %s2 = inlined_call_operand.vmem [shape: f32[8,12], index: 2, kind: input, shape index: {}]
  %s3 = inlined_call_operand.vmem [shape: f32[8,1], index: 3, kind: input, shape index: {}]
  %s4 = inlined_call_operand.hbm [shape: f32[2,8,128], index: 4, kind: output, shape index: {}]
  %s5 = sld [smem:[#allocation0]]
  $region57: #{tpu_custom_call.1} parent=0
    _
  %s7 = ssub.s32 1, %s5
  %s8 = scalar_select 0, %s7, %s5
  $region1: #{tpu_custom_call.1} parent=0
    #allocation2 [shape = 'u8[4096]{0}', space=vmem, size = 0x1000, scoped, tag = 'input window, operand 0']
    #allocation3 [shape = 's32[2]{0}', space=sflag, size = 0x8, scoped, tag = 'scoped memory for tpu_custom_call.1']
    #allocation4 [shape = 's32[2]{0}', space=sflag, size = 0x8, scoped, tag = 'scoped memory for tpu_custom_call.1']
    #allocation5 [shape = 'u8[4096]{0}', space=vmem, size = 0x1000, scoped, tag = 'input window, operand 1']
    #allocation6 [shape = 's32[2]{0}', space=sflag, size = 0x8, scoped, tag = 'scoped memory for tpu_custom_call.1']
    #allocation7 [shape = 'u8[8192]{0}', space=vmem, size = 0x2000, scoped, tag = 'output window, operand 0']
    %9 = vsyncpa [#allocation3], 0
    %s10 = scalar_lea.sflag [#allocation3], 1
    %11 = vsyncpa %s10, 0
    %12 = vsyncpa [#allocation6], 0
    %s13 = scalar_lea.sflag [#allocation6], 1
    %14 = vsyncpa %s13, 0
    %15 = vsyncpa [#allocation4], 0
    %s16 = scalar_lea.sflag [#allocation4], 1
    %17 = vsyncpa %s16, 0
    loop: start=0, step=1, limit=4
    $region2: #{tpu_custom_call.1} parent=1 // loop_pre_header
      _
    $region3: #{tpu_custom_call.1} parent=1 // loop_header
      %s19 = sphi 0, %s23
      %p20 = scmp.ge.s32.totalorder %s19, 4
      %s26 = sphi 0, %s45
      %s27 = sphi 0, %s41
      %s28 = sphi 0, %s37
      %s29 = sphi 0, %s26
      %s30 = sphi 0, %s27
      %s31 = sphi 0, %s28
      %s32 = sphi 0, %s29
      %s33 = sphi 0, %s30
      %s34 = sphi 0, %s31
      %s50 = sphi 0, %s52
      %s53 = sphi 0, %s50
      %s54 = sphi 0, %s53
      %s70 = sphi 0, %s54
      %s80 = sphi 0, %s82
      %s83 = sphi 0, %s80
      %s84 = sphi 0, %s83
      %s100 = sphi 0, %s84
      %s106 = sphi 0, %s108
      %s109 = sphi 0, %s106
      %s110 = sphi 0, %s109
      %s126 = sphi 0, %s110
      %s132 = sphi 0, %s134
      %s135 = sphi 0, %s132
      %s136 = sphi 0, %s135
      %s152 = sphi 0, %s136
      %s162 = sphi 0, %s164
      %s165 = sphi 0, %s162
      %s166 = sphi 0, %s165
      %s182 = sphi 0, %s166
    $region4: #{tpu_custom_call.1} parent=1 // loop_header_branch
      %22 = sbr.rel (%p20) target = $region8
    $region5: #{tpu_custom_call.1} parent=1 // loop_body
      %s24 = ssub.s32 %s19, 1
      %s25 = ssub.s32 %s19, 2
      %s35 = sadd.s32 1, %s28
      %p36 = scmp.ge.s32.totalorder %s35, 1
      %s37 = scalar_select %p36, 0, %s35
      %s38 = sadd.s32 1, %s27
      %s39 = scalar_select %p36, %s38, %s27
      %p40 = scmp.ge.s32.totalorder %s39, 1
      %s41 = scalar_select %p40, 0, %s39
      %s42 = sadd.s32 1, %s26
      %s43 = scalar_select %p40, %s42, %s26
      %p44 = scmp.ge.s32.totalorder %s43, 2
      %s45 = scalar_select %p44, 0, %s43
      %s46 = ssub.s32 %s26, %s45
      %s47 = ssub.s32 %s28, %s37
      %s48 = sor.u32 %s46, %s47
      %p49 = scmp.eq.s32.totalorder %s48, 0
      %s51 = sadd.s32 %s50, 1
      %s52 = scalar_select %p49, %s50, %s51
      %p55 = pneg %p49
      %p56 = scmp.eq.s32.totalorder %s19, 1
      %p57 = por %p55, %p56
      %p58 = scmp.ne.s32.totalorder %s50, %s53
      %p59 = scmp.eq.s32.totalorder %s19, 0
      %p60 = por %p58, %p59
      %p61 = scmp.ne.s32.totalorder %s50, %s53
      %p62 = scmp.eq.s32.totalorder %s24, 1
      %p63 = por %p61, %p62
      %p64 = scmp.ne.s32.totalorder %s53, %s54
      %p65 = scmp.eq.s32.totalorder %s24, 0
      %p66 = por %p64, %p65
      %p67 = scmp.ne.s32.totalorder %s53, %s54
      %p68 = scmp.eq.s32.totalorder %s25, 1
      %p69 = por %p67, %p68
      %p71 = scmp.ne.s32.totalorder %s54, %s70
      %p72 = scmp.eq.s32.totalorder %s25, 0
      %p73 = por %p71, %p72
      %s74 = sadd.s32 %s28, 1
      %s75 = sadd.s32 %s37, 1
      %s76 = ssub.s32 %s26, %s45
      %s77 = ssub.s32 %s74, %s75
      %s78 = sor.u32 %s76, %s77
      %p79 = scmp.eq.s32.totalorder %s78, 0
      %s81 = sadd.s32 %s80, 1
      %s82 = scalar_select %p79, %s80, %s81
      %p85 = pneg %p79
      %p86 = scmp.eq.s32.totalorder %s19, 1
      %p87 = por %p85, %p86
      %p88 = scmp.ne.s32.totalorder %s80, %s83
      %p89 = scmp.eq.s32.totalorder %s19, 0
      %p90 = por %p88, %p89
      %p91 = scmp.ne.s32.totalorder %s80, %s83
      %p92 = scmp.eq.s32.totalorder %s24, 1
      %p93 = por %p91, %p92
      %p94 = scmp.ne.s32.totalorder %s83, %s84
      %p95 = scmp.eq.s32.totalorder %s24, 0
      %p96 = por %p94, %p95
      %p97 = scmp.ne.s32.totalorder %s83, %s84
      %p98 = scmp.eq.s32.totalorder %s25, 1
      %p99 = por %p97, %p98
      %p101 = scmp.ne.s32.totalorder %s84, %s100
      %p102 = scmp.eq.s32.totalorder %s25, 0
      %p103 = por %p101, %p102
      %s104 = ssub.s32 %s27, %s41
      %p105 = scmp.eq.s32.totalorder %s104, 0
      %s107 = sadd.s32 %s106, 1
      %s108 = scalar_select %p105, %s106, %s107
      %p111 = pneg %p105
      %p112 = scmp.eq.s32.totalorder %s19, 1
      %p113 = por %p111, %p112
      %p114 = scmp.ne.s32.totalorder %s106, %s109
      %p115 = scmp.eq.s32.totalorder %s19, 0
      %p116 = por %p114, %p115
      %p117 = scmp.ne.s32.totalorder %s106, %s109
      %p118 = scmp.eq.s32.totalorder %s24, 1
      %p119 = por %p117, %p118
      %p120 = scmp.ne.s32.totalorder %s109, %s110
      %p121 = scmp.eq.s32.totalorder %s24, 0
      %p122 = por %p120, %p121
      %p123 = scmp.ne.s32.totalorder %s109, %s110
      %p124 = scmp.eq.s32.totalorder %s25, 1
      %p125 = por %p123, %p124
      %p127 = scmp.ne.s32.totalorder %s110, %s126
      %p128 = scmp.eq.s32.totalorder %s25, 0
      %p129 = por %p127, %p128
      %s130 = ssub.s32 %s27, %s41
      %p131 = scmp.eq.s32.totalorder %s130, 0
      %s133 = sadd.s32 %s132, 1
      %s134 = scalar_select %p131, %s132, %s133
      %p137 = pneg %p131
      %p138 = scmp.eq.s32.totalorder %s19, 1
      %p139 = por %p137, %p138
      %p140 = scmp.ne.s32.totalorder %s132, %s135
      %p141 = scmp.eq.s32.totalorder %s19, 0
      %p142 = por %p140, %p141
      %p143 = scmp.ne.s32.totalorder %s132, %s135
      %p144 = scmp.eq.s32.totalorder %s24, 1
      %p145 = por %p143, %p144
      %p146 = scmp.ne.s32.totalorder %s135, %s136
      %p147 = scmp.eq.s32.totalorder %s24, 0
      %p148 = por %p146, %p147
      %p149 = scmp.ne.s32.totalorder %s135, %s136
      %p150 = scmp.eq.s32.totalorder %s25, 1
      %p151 = por %p149, %p150
      %p153 = scmp.ne.s32.totalorder %s136, %s152
      %p154 = scmp.eq.s32.totalorder %s25, 0
      %p155 = por %p153, %p154
      %s156 = ssub.s32 %s26, %s45
      %s157 = ssub.s32 %s27, %s41
      %s158 = sor.u32 %s156, %s157
      %s159 = ssub.s32 %s28, %s37
      %s160 = sor.u32 %s158, %s159
      %p161 = scmp.eq.s32.totalorder %s160, 0
      %s163 = sadd.s32 %s162, 1
      %s164 = scalar_select %p161, %s162, %s163
      %p167 = pneg %p161
      %p168 = scmp.eq.s32.totalorder %s19, 1
      %p169 = por %p167, %p168
      %p170 = scmp.ne.s32.totalorder %s162, %s165
      %p171 = scmp.eq.s32.totalorder %s19, 0
      %p172 = por %p170, %p171
      %p173 = scmp.ne.s32.totalorder %s162, %s165
      %p174 = scmp.eq.s32.totalorder %s24, 1
      %p175 = por %p173, %p174
      %p176 = scmp.ne.s32.totalorder %s165, %s166
      %p177 = scmp.eq.s32.totalorder %s24, 0
      %p178 = por %p176, %p177
      %p179 = scmp.ne.s32.totalorder %s165, %s166
      %p180 = scmp.eq.s32.totalorder %s25, 1
      %p181 = por %p179, %p180
      %p183 = scmp.ne.s32.totalorder %s166, %s182
      %p184 = scmp.eq.s32.totalorder %s25, 0
      %p185 = por %p183, %p184
      %p186 = scmp.le.s32.totalorder 1, %s19
      %p187 = scmp.lt.s32.totalorder %s19, 3
      %p188 = pnand %p186, %p187
      %p189 = pneg %p188
      // Predicated region
      $region9: #{tpu_custom_call.1} parent=5 // pred_check
        _
      $region10: #{tpu_custom_call.1} parent=5 // pred_check_branch
        %191 = sbr.rel (%p188) target = $region12
      $region11: #{tpu_custom_call.1} parent=5 // pred_region
        %s192 = ssub.s32 %s19, 1
        // Predicated region
        $region13: #{tpu_custom_call.1} parent=11 // pred_check
          %p193 = pneg %p122
        $region14: #{tpu_custom_call.1} parent=11 // pred_check_branch
          %195 = sbr.rel (%p193) target = $region16
        $region15: #{tpu_custom_call.1} parent=11 // pred_region
          %p196 = scmp.lt.s32.totalorder %s30, 0
          %s197 = scalar_select %p196, %s30, 0
          %s198 = smul.addr %s197, 8
          %s199 = scalar_lea.vmem %s2, %s198
        $region16: #{tpu_custom_call.1} parent=11 // pred_fallthru
          _
        // Predicated region
        $region17: #{tpu_custom_call.1} parent=11 // pred_check
          %p200 = pneg %p148
        $region18: #{tpu_custom_call.1} parent=11 // pred_check_branch
          %202 = sbr.rel (%p200) target = $region20
        $region19: #{tpu_custom_call.1} parent=11 // pred_region
          %p203 = scmp.lt.s32.totalorder %s30, 0
          %s204 = scalar_select %p203, %s30, 0
          %s205 = smul.addr %s204, 8
          %s206 = scalar_lea.vmem %s3, %s205
        $region20: #{tpu_custom_call.1} parent=11 // pred_fallthru
          _
      $region12: #{tpu_custom_call.1} parent=5 // pred_fallthru
        _
      %p207 = scmp.lt.s32.totalorder %s19, 2
      // Predicated region
      $region21: #{tpu_custom_call.1} parent=5 // pred_check
        %p208 = pneg %p207
      $region22: #{tpu_custom_call.1} parent=5 // pred_check_branch
        %210 = sbr.rel (%p208) target = $region24
      $region23: #{tpu_custom_call.1} parent=5 // pred_region
        // Predicated region
        $region25: #{tpu_custom_call.1} parent=23 // pred_check
          %p211 = pneg %p60
        $region26: #{tpu_custom_call.1} parent=23 // pred_check_branch
          %213 = sbr.rel (%p211) target = $region28
        $region27: #{tpu_custom_call.1} parent=23 // pred_region
          %s214 = sand.u32 %s50, 1
          %s215 = scalar_lea.sflag [#allocation3], %s214
          %s216 = sand.u32 %s50, 1
          %s217 = smul.addr %s216, 4
          %s218 = scalar_lea.vmem [#allocation2], %s217
          %s220 = ssub.s32 64, 64
          %221 = vsyncadd %s215, %s220
          %s222 = smul.addr %s26, 2
          %s223 = sadd.s32 %s28, %s222
          %s224 = smul.addr %s223, 64
          %s225 = scalar_lea.hbm %s0, %s224
          %s227 = sshll.u32 %s218, 4
          %s228 = int_to_ptr.vmem [resolvable:$true] %s227
          %230 = dma.hbm_to_vmem [thread:$0]  %s225, 64, %s228, %s215
        $region28: #{tpu_custom_call.1} parent=23 // pred_fallthru
          _
        // Predicated region
        $region29: #{tpu_custom_call.1} parent=23 // pred_check
          %p231 = pneg %p90
        $region30: #{tpu_custom_call.1} parent=23 // pred_check_branch
          %233 = sbr.rel (%p231) target = $region32
        $region31: #{tpu_custom_call.1} parent=23 // pred_region
          %s234 = sand.u32 %s80, 1
          %s235 = scalar_lea.sflag [#allocation6], %s234
          %s236 = sand.u32 %s80, 1
          %s237 = smul.addr %s236, 4
          %s238 = scalar_lea.vmem [#allocation5], %s237
          %s239 = sadd.s32 %s28, 1
          %s241 = ssub.s32 64, 64
          %242 = vsyncadd %s235, %s241
          %s243 = smul.addr %s26, 2
          %s244 = sadd.s32 %s239, %s243
          %s245 = smul.addr %s244, 64
          %s246 = scalar_lea.hbm %s1, %s245
          %s248 = sshll.u32 %s238, 4
          %s249 = int_to_ptr.vmem [resolvable:$true] %s248
          %251 = dma.hbm_to_vmem [thread:$0]  %s246, 64, %s249, %s235
        $region32: #{tpu_custom_call.1} parent=23 // pred_fallthru
          _
      $region24: #{tpu_custom_call.1} parent=5 // pred_fallthru
        _
      %p252 = scmp.le.s32.totalorder 1, %s19
      %p253 = scmp.lt.s32.totalorder %s19, 3
      %p254 = pnand %p252, %p253
      %p255 = pneg %p254
      // Predicated region
      $region33: #{tpu_custom_call.1} parent=5 // pred_check
        _
      $region34: #{tpu_custom_call.1} parent=5 // pred_check_branch
        %257 = sbr.rel (%p254) target = $region36
      $region35: #{tpu_custom_call.1} parent=5 // pred_region
        %s258 = ssub.s32 %s19, 1
        %s259 = sand.u32 %s53, 1
        %s260 = scalar_lea.sflag [#allocation3], %s259
        %s261 = sand.u32 %s53, 1
        %s262 = smul.addr %s261, 4
        %s263 = scalar_lea.vmem [#allocation2], %s262
        // Predicated region
        $region37: #{tpu_custom_call.1} parent=35 // pred_check
          %p264 = pneg %p66
        $region38: #{tpu_custom_call.1} parent=35 // pred_check_branch
          %266 = sbr.rel (%p264) target = $region40
        $region39: #{tpu_custom_call.1} parent=35 // pred_region
          %267 = dma.done %s260, 64
        $region40: #{tpu_custom_call.1} parent=35 // pred_fallthru
          _
        %s268 = sand.u32 %s83, 1
        %s269 = scalar_lea.sflag [#allocation6], %s268
        %s270 = sand.u32 %s83, 1
        %s271 = smul.addr %s270, 4
        %s272 = scalar_lea.vmem [#allocation5], %s271
        // Predicated region
        $region41: #{tpu_custom_call.1} parent=35 // pred_check
          %p273 = pneg %p96
        $region42: #{tpu_custom_call.1} parent=35 // pred_check_branch
          %275 = sbr.rel (%p273) target = $region44
        $region43: #{tpu_custom_call.1} parent=35 // pred_region
          %276 = dma.done %s269, 64
        $region44: #{tpu_custom_call.1} parent=35 // pred_fallthru
          _
        %s277 = sand.u32 %s53, 1
        %s278 = scalar_lea.sflag [#allocation3], %s277
        %s279 = sand.u32 %s53, 1
        %s280 = smul.addr %s279, 4
        %s281 = scalar_lea.vmem [#allocation2], %s280
        %p282 = pneg %p66
        %p283 = pneg %p63
        %s284 = sand.u32 %s83, 1
        %s285 = scalar_lea.sflag [#allocation6], %s284
        %s286 = sand.u32 %s83, 1
        %s287 = smul.addr %s286, 4
        %s288 = scalar_lea.vmem [#allocation5], %s287
        %p289 = pneg %p96
        %p290 = pneg %p93
        %p291 = scmp.lt.s32.totalorder %s30, 0
        %s292 = scalar_select %p291, %s30, 0
        %s293 = smul.addr %s292, 8
        %s294 = scalar_lea.vmem %s2, %s293
        %p295 = pneg %p122
        %p296 = pneg %p119
        %p297 = scmp.lt.s32.totalorder %s30, 0
        %s298 = scalar_select %p297, %s30, 0
        %s299 = smul.addr %s298, 8
        %s300 = scalar_lea.vmem %s3, %s299
        %p301 = pneg %p148
        %p302 = pneg %p145
        %p303 = pneg %p178
        %p304 = pneg %p175
        %s305 = sand.u32 %s165, 1
        %s306 = scalar_lea.sflag [#allocation4], %s305
        %s307 = sand.u32 %s165, 1
        %s308 = smul.addr %s307, 8
        %s309 = scalar_lea.vmem [#allocation7], %s308
        %s310 = sadd.s32 %s31, 1
        %p311 = scmp.lt.s32.totalorder %s30, 0
        %s312 = scalar_select %p311, %s30, 0
        %s313 = smul.addr %s312, 8
        %s314 = scalar_lea.vmem %s2, %s313
        %p315 = scmp.lt.s32.totalorder %s30, 0
        %s316 = scalar_select %p315, %s30, 0
        %s317 = smul.addr %s316, 8
        %s318 = scalar_lea.vmem %s3, %s317
        %v319 = vld [vmem:[%s263] sm:$0xf]
        %v320 = vld [vmem:[%s272] sm:$0xf]
        %v323 = vrot.slane %v319, 4
        %v324 = vrot.slane %v320, 4
        %325 = vrot.lane.b32.xlu0 %v323, 127
        %v326 = vpop.permute.xlu0 %325
        %327 = vrot.lane.b32.xlu0 %v324, 127
        %v328 = vpop.permute.xlu0 %327
        %vm329 = vcmask 1039360
        %v330 = vsel %vm329, %v326, %v328
        %332 = vrot.lane.b32.xlu0 %v319, 126
        %v333 = vpop.permute.xlu0 %332
        %334 = vrot.lane.b32.xlu0 %v320, 126
        %v335 = vpop.permute.xlu0 %334
        %vm336 = vcmask 1031168
        %v337 = vsel %vm336, %v333, %v335
        %vm338 = vcmask 1043456
        %v339 = vsel %vm338, %v319, %v330
        %v340 = vld [vmem:[%s314] sm:$0xff]
        %v341 = vld [vmem:[%s318] sm:$0xff]
        %343 = vset.pattern.permute.xlu0 0
        %344 = vperm.xlu0 %343, %v341
        %v345 = vpop.permute.xlu0 %344
        %vm347 = vcmask 97280
        %v349 = vsel %vm347, %v340, 0
        %v351 = vsel %vm338, %v337, 0
        %353 = vmatprep.subr.mxu0 0.0
        %354 = vmatpush1.msra.mxu0 %v339
        %355 = vmatprep.subr.mxu0 0.0
        %356 = vmatpush1.msra.mxu0 %v351
        %357 = vmatprep.subr.mxu0 0.0
        %358 = vmatpush1.msra.mxu0 0.0
        %359 = vmatprep.subr.mxu0 0.0
        %360 = vmatpush1.msra.mxu0 0.0
        %361 = vmatprep.subr.mxu0 0.0
        %362 = vmatpush1.msra.mxu0 0.0
        %363 = vmatprep.subr.mxu0 0.0
        %364 = vmatpush1.msra.mxu0 0.0
        %365 = vmatprep.subr.mxu0 0.0
        %366 = vmatpush1.msra.mxu0 0.0
        %367 = vmatprep.subr.mxu0 0.0
        %368 = vmatpush1.msra.mxu0 0.0
        %369 = vmatprep.subr.mxu0 0.0
        %370 = vmatpush1.msra.mxu0 0.0
        %371 = vmatprep.subr.mxu0 0.0
        %372 = vmatpush1.msra.mxu0 0.0
        %373 = vmatprep.subr.mxu0 0.0
        %374 = vmatpush1.msra.mxu0 0.0
        %375 = vmatprep.subr.mxu0 0.0
        %376 = vmatpush1.msra.mxu0 0.0
        %377 = vmatprep.subr.mxu0 0.0
        %378 = vmatpush1.msra.mxu0 0.0
        %379 = vmatprep.subr.mxu0 0.0
        %380 = vmatpush1.msra.mxu0 0.0
        %381 = vmatprep.subr.mxu0 0.0
        %382 = vmatpush1.msra.mxu0 0.0
        %383 = vmatprep.subr.mxu0 0.0
        %384 = vmatpush1.msra.mxu0 0.0
        %385 = vmatprep.subr.mxu0 0.0
        %386 = vmatpush1.msra.mxu0 0.0
        %387 = vmatprep.subr.mxu0 0.0
        %388 = vmatpush1.msra.mxu0 0.0
        %389 = vmatprep.subr.mxu0 0.0
        %390 = vmatpush1.msra.mxu0 0.0
        %391 = vmatprep.subr.mxu0 0.0
        %392 = vmatpush1.msra.mxu0 0.0
        %393 = vmatprep.subr.mxu0 0.0
        %394 = vmatpush1.msra.mxu0 0.0
        %395 = vmatprep.subr.mxu0 0.0
        %396 = vmatpush1.msra.mxu0 0.0
        %397 = vmatprep.subr.mxu0 0.0
        %398 = vmatpush1.msra.mxu0 0.0
        %399 = vmatprep.subr.mxu0 0.0
        %400 = vmatpush1.msra.mxu0 0.0
        %401 = vmatprep.subr.mxu0 0.0
        %402 = vmatpush1.msra.mxu0 0.0
        %403 = vmatprep.subr.mxu0 0.0
        %404 = vmatpush1.msra.mxu0 0.0
        %405 = vmatprep.subr.mxu0 0.0
        %406 = vmatpush1.msra.mxu0 0.0
        %407 = vmatprep.subr.mxu0 0.0
        %408 = vmatpush1.msra.mxu0 0.0
        %409 = vmatprep.subr.mxu0 0.0
        %410 = vmatpush1.msra.mxu0 0.0
        %411 = vmatprep.subr.mxu0 0.0
        %412 = vmatpush1.msra.mxu0 0.0
        %413 = vmatprep.subr.mxu0 0.0
        %414 = vmatpush1.msra.mxu0 0.0
        %415 = vmatprep.subr.mxu0 0.0
        %416 = vmatpush1.msra.mxu0 0.0
        %417 = vmatprep.mubr.f32.mxu0 0.0
        %418 = vmatmul.mubr.f32.gmra.mrb[0].mxu0 %v349
        %v419 = vpop.f32.mrb[0].mxu0
        %v420 = vadd.f32 %v345, %v419
        %v421 = vpop.f32.mrb[0].mxu0
        %422 = vdwg.mxu0
        %423 = vst [vmem:[%s309] sm:$0xff] %v420
        %s424 = sand.u32 %s165, 1
        %s425 = scalar_lea.sflag [#allocation4], %s424
        %s426 = sand.u32 %s165, 1
        %s427 = smul.addr %s426, 8
        %s428 = scalar_lea.vmem [#allocation7], %s427
        // Predicated region
        $region45: #{tpu_custom_call.1} parent=35 // pred_check
          %p429 = pneg %p175
        $region46: #{tpu_custom_call.1} parent=35 // pred_check_branch
          %431 = sbr.rel (%p429) target = $region48
        $region47: #{tpu_custom_call.1} parent=35 // pred_region
          %s433 = ssub.s32 128, 128
          %434 = vsyncadd %s425, %s433
          %s435 = sadd.s32 %s31, %s30
          %s436 = sadd.s32 %s435, %s29
          %s437 = smul.addr %s436, 128
          %s438 = scalar_lea.hbm %s4, %s437
          %s440 = sshll.u32 %s428, 4
          %s441 = int_to_ptr.vmem [resolvable:$true] %s440
          %443 = dma.vmem_to_hbm [thread:$0]  %s441, 128, %s438, %s425
        $region48: #{tpu_custom_call.1} parent=35 // pred_fallthru
          _
      $region36: #{tpu_custom_call.1} parent=5 // pred_fallthru
        _
      %p444 = scmp.le.s32.totalorder 2, %s19
      // Predicated region
      $region49: #{tpu_custom_call.1} parent=5 // pred_check
        %p445 = pneg %p444
      $region50: #{tpu_custom_call.1} parent=5 // pred_check_branch
        %447 = sbr.rel (%p445) target = $region52
      $region51: #{tpu_custom_call.1} parent=5 // pred_region
        %s448 = ssub.s32 %s19, 2
        // Predicated region
        $region53: #{tpu_custom_call.1} parent=51 // pred_check
          %p449 = pneg %p181
        $region54: #{tpu_custom_call.1} parent=51 // pred_check_branch
          %451 = sbr.rel (%p449) target = $region56
        $region55: #{tpu_custom_call.1} parent=51 // pred_region
          %s452 = sand.u32 %s166, 1
          %s453 = scalar_lea.sflag [#allocation4], %s452
          %s454 = sand.u32 %s166, 1
          %s455 = smul.addr %s454, 8
          %s456 = scalar_lea.vmem [#allocation7], %s455
          %457 = dma.done %s453, 128
        $region56: #{tpu_custom_call.1} parent=51 // pred_fallthru
          _
      $region52: #{tpu_custom_call.1} parent=5 // pred_fallthru
        _
    $region6: #{tpu_custom_call.1} parent=1 // loop_footer
      %s23 = sadd.s32 1, %s19
    $region7: #{tpu_custom_call.1} parent=1 // loop_footer_branch
      %18 = sbr.rel target = $region3
    $region8: #{tpu_custom_call.1} parent=1 // loop_exit
      _
    %458 = vsyncpa [#allocation3], 1
    %s459 = scalar_lea.sflag [#allocation3], 1
    %460 = vsyncpa %s459, 1
    %461 = vsyncpa [#allocation6], 1
    %s462 = scalar_lea.sflag [#allocation6], 1
    %463 = vsyncpa %s462, 1
    %464 = vsyncpa [#allocation4], 1
    %s465 = scalar_lea.sflag [#allocation4], 1
    %466 = vsyncpa %s465, 1

</llo_original>
